<compile_context>
chip_gen: v6e
topology: v6e:2x2x1
jax: 0.10.0
libtpu: 0.0.40
codegen_flags: <defaults>
</compile_context>

<pallas_src>
import jax
import jax.numpy as jnp
from jax.experimental import pallas as pl
from jax.experimental.pallas import tpu as pltpu


def _layer_norm(h, gamma, beta, eps=1e-5):
    mu = jnp.mean(h, axis=-1, keepdims=True)
    var = jnp.mean((h - mu) ** 2, axis=-1, keepdims=True)
    return (h - mu) * jax.lax.rsqrt(var + eps) * gamma + beta


def _make_kernel(approx_recip):
    def kernel(x_ref, wq_ref, wkv_ref, wo_ref, w1_ref, b1_ref, w2_ref, b2_ref,
               g1_ref, be1_ref, g2_ref, be2_ref, o_ref, kv_ref):
        qi = pl.program_id(1)
        tq = o_ref.shape[1]
        rp = wq_ref.shape[1]
        cdt = wq_ref.dtype                     # MXU operand dtype (f32 or bf16)

        # ---- K/V for the whole sequence, computed once per batch element ----
        @pl.when(qi == 0)
        def _():
            xf = x_ref[0].astype(cdt)                                     # (S, D)
            kv_ref[...] = jnp.dot(xf, wkv_ref[...],
                                  preferred_element_type=jnp.float32)     # (S, 2Rp)

        # ---- query tile ----
        q0 = pl.multiple_of(qi * tq, tq)
        xq = x_ref[0, pl.ds(q0, tq), :].astype(jnp.float32)               # (TQ, D)

        # Q projection (1/sqrt(rank) already folded into Wq by the wrapper)
        q = jnp.dot(xq.astype(cdt), wq_ref[...],
                    preferred_element_type=jnp.float32)                   # (TQ, Rp)
        k = kv_ref[:, :rp]                                                # (S, Rp)
        v = kv_ref[:, rp:]                                                # (S, Rp)

        # scores: contract last dims of Q and K directly (no K.T materialization)
        s = jax.lax.dot_general(q.astype(cdt), k.astype(cdt),
                                (((1,), (1,)), ((), ())),
                                preferred_element_type=jnp.float32)       # (TQ, S)
        s = s - jnp.max(s, axis=-1, keepdims=True)
        p = jnp.exp(s)
        denom = jnp.sum(p, axis=-1, keepdims=True)                        # (TQ, 1)
        av = jnp.dot(p.astype(cdt), v.astype(cdt),
                     preferred_element_type=jnp.float32)                  # (TQ, Rp)
        av = av * pl.reciprocal(denom, approx=approx_recip)               # normalize small side
        attn = jnp.dot(av.astype(cdt), wo_ref[...],
                       preferred_element_type=jnp.float32)                # (TQ, D)

        # ---- residual + LayerNorm 1 (dropout == identity, eval mode) ----
        h = _layer_norm(xq + attn, g1_ref[...], be1_ref[...])

        # ---- FFN: Linear(D, 3D) -> exact GELU -> Linear(3D, D) ----
        f = jnp.dot(h.astype(cdt), w1_ref[...],
                    preferred_element_type=jnp.float32) + b1_ref[...]     # (TQ, 3D)
        f = 0.5 * f * (1.0 + jax.lax.erf(f * jnp.float32(0.7071067811865476)))
        f = jnp.dot(f.astype(cdt), w2_ref[...],
                    preferred_element_type=jnp.float32) + b2_ref[...]     # (TQ, D)

        # ---- residual + LayerNorm 2 ----
        y = _layer_norm(h + f, g2_ref[...], be2_ref[...])
        o_ref[0] = y.astype(o_ref.dtype)

    return kernel


def _pick_q_tile(S, tile_q=None, target=256):
    if tile_q is not None:
        assert S % tile_q == 0 and (tile_q % 8 == 0 or tile_q == S)
        return tile_q
    if S <= target or S % 8 != 0:
        return S
    t = min(target, S)
    t -= t % 8
    while t >= 8:
        if S % t == 0:
            return t
        t -= 8
    return S


def low_rank_transformer_layer(x, params, *, compute_dtype=jnp.float32,
                               tile_q=None, interpret=False):
    B, S, D = x.shape
    R = params["wq"].shape[0]
    H = params["w1"].shape[0]            # 3 * D
    Rp = -(-R // 128) * 128              # pad rank up to a lane-dense 128 multiple
    TQ = _pick_q_tile(S, tile_q)
    NQ = S // TQ

    f32 = jnp.float32
    # Pre-transpose to (in, out), fold 1/sqrt(rank) into Wq, zero-pad rank -> Rp.
    wq_t = jnp.pad(params["wq"].astype(f32).T / (R ** 0.5), ((0, 0), (0, Rp - R)))
    wk_t = jnp.pad(params["wk"].astype(f32).T, ((0, 0), (0, Rp - R)))
    wv_t = jnp.pad(params["wv"].astype(f32).T, ((0, 0), (0, Rp - R)))
    wkv_t = jnp.concatenate([wk_t, wv_t], axis=1)                      # (D, 2*Rp)
    wo_t = jnp.pad(params["wo"].astype(f32).T, ((0, Rp - R), (0, 0)))  # (Rp, D)
    w1_t = params["w1"].astype(f32).T                                  # (D, H)
    w2_t = params["w2"].astype(f32).T                                  # (H, D)

    cdt = jnp.dtype(compute_dtype)
    wq_t, wkv_t, wo_t, w1_t, w2_t = [w.astype(cdt)
                                     for w in (wq_t, wkv_t, wo_t, w1_t, w2_t)]

    const = lambda b, q: (0, 0)
    in_specs = [
        pl.BlockSpec((1, S, D), lambda b, q: (b, 0, 0)),   # x (full seq per batch)
        pl.BlockSpec((D, Rp), const),                      # Wq^T (scaled, padded)
        pl.BlockSpec((D, 2 * Rp), const),                  # [Wk^T | Wv^T]
        pl.BlockSpec((Rp, D), const),                      # Wo^T
        pl.BlockSpec((D, H), const),                       # W1^T
        pl.BlockSpec((1, H), const),                       # b1
        pl.BlockSpec((H, D), const),                       # W2^T
        pl.BlockSpec((1, D), const),                       # b2
        pl.BlockSpec((1, D), const),                       # gamma1
        pl.BlockSpec((1, D), const),                       # beta1
        pl.BlockSpec((1, D), const),                       # gamma2
        pl.BlockSpec((1, D), const),                       # beta2
    ]
    out_specs = pl.BlockSpec((1, TQ, D), lambda b, q: (b, q, 0))

    # VMEM budget for this tiling (double-buffered blocks + scratch + temporaries)
    wbytes = (D * Rp + D * 2 * Rp + Rp * D + D * H + H * D) * cdt.itemsize
    small = (2 * H + 6 * D) * 4
    act = (S * D + TQ * D) * x.dtype.itemsize
    scratch = S * 2 * Rp * 4
    temps = (TQ * S + TQ * H + 6 * TQ * D + S * 2 * Rp) * 4
    est = 2 * (wbytes + small + act) + scratch + temps
    vmem_limit = int(min(max(2 * est, 32 * 2**20), 100 * 2**20))

    fn = pl.pallas_call(
        _make_kernel(approx_recip=(cdt == jnp.dtype(jnp.bfloat16))),
        out_shape=jax.ShapeDtypeStruct((B, S, D), x.dtype),
        grid_spec=pltpu.PrefetchScalarGridSpec(
            num_scalar_prefetch=0,
            grid=(B, NQ),
            in_specs=in_specs,
            out_specs=out_specs,
            scratch_shapes=[pltpu.VMEM((S, 2 * Rp), jnp.float32)],
        ),
        compiler_params=pltpu.CompilerParams(
            dimension_semantics=("parallel", "arbitrary"),
            vmem_limit_bytes=vmem_limit,
        ),
        interpret=interpret,
    )
    return fn(x, wq_t, wkv_t, wo_t, w1_t, params["b1"], w2_t, params["b2"],
              params["gamma1"], params["beta1"], params["gamma2"], params["beta2"])


def reference_forward(x, params):
    """Pure-JAX reference replicating the PyTorch forward (eval mode)."""
    R = params["wq"].shape[0]
    Q = x @ params["wq"].T
    K = x @ params["wk"].T
    V = x @ params["wv"].T
    A = jnp.einsum("bsr,btr->bst", Q, K) / (R ** 0.5)
    A = jax.nn.softmax(A, axis=-1)
    AV = jnp.einsum("bst,btr->bsr", A, V)
    attn = AV @ params["wo"].T

    def ln(h, g, b):
        mu = jnp.mean(h, axis=-1, keepdims=True)
        var = jnp.mean((h - mu) ** 2, axis=-1, keepdims=True)
        return (h - mu) / jnp.sqrt(var + 1e-5) * g + b

    h = ln(x + attn, params["gamma1"][0], params["beta1"][0])
    f = h @ params["w1"].T + params["b1"][0]
    f = 0.5 * f * (1.0 + jax.lax.erf(f / jnp.sqrt(2.0)))
    f = f @ params["w2"].T + params["b2"][0]
    return ln(h + f, params["gamma2"][0], params["beta2"][0])


def init_params(key, dim, rank):
    ks = jax.random.split(key, 8)
    u = lambda k, shape, fan_in: jax.random.uniform(
        k, shape, jnp.float32, -1.0 / (fan_in ** 0.5), 1.0 / (fan_in ** 0.5))
    return {
        "wq": u(ks[0], (rank, dim), dim),
        "wk": u(ks[1], (rank, dim), dim),
        "wv": u(ks[2], (rank, dim), dim),
        "wo": u(ks[3], (dim, rank), rank),
        "w1": u(ks[4], (dim * 3, dim), dim),
        "b1": u(ks[5], (1, dim * 3), dim),
        "w2": u(ks[6], (dim, dim * 3), dim * 3),
        "b2": u(ks[7], (1, dim), dim * 3),
        "gamma1": jnp.ones((1, dim), jnp.float32),
        "beta1": jnp.zeros((1, dim), jnp.float32),
        "gamma2": jnp.ones((1, dim), jnp.float32),
        "beta2": jnp.zeros((1, dim), jnp.float32),
    }


if __name__ == "__main__":
    key = jax.random.PRNGKey(0)
    kx, kp, k2x, k2p = jax.random.split(key, 4)

    # Config 1: tiny shapes matching the module defaults (single query tile).
    B, S, D, R = 2, 8, 32, 8
    x = jax.random.normal(kx, (B, S, D), jnp.float32)
    params = init_params(kp, D, R)

    out = jax.block_until_ready(low_rank_transformer_layer(x, params))
    ref = reference_forward(x, params)
    assert out.shape == (B, S, D)
    assert jnp.allclose(out, ref, atol=1e-4, rtol=1e-4), "f32 mismatch vs reference"

    # bf16 MXU operands / f32 accumulation path (looser tolerance).
    out_bf16 = jax.block_until_ready(
        low_rank_transformer_layer(x, params, compute_dtype=jnp.bfloat16))
    assert float(jnp.max(jnp.abs(out_bf16 - ref))) < 0.25, "bf16 path diverged"

    # Config 2: shapes that actually exercise the query tiling (4 tiles of 64).
    B2, S2, D2, R2 = 2, 256, 128, 16
    x2 = jax.random.normal(k2x, (B2, S2, D2), jnp.float32)
    params2 = init_params(k2p, D2, R2)
    out2 = jax.block_until_ready(
        low_rank_transformer_layer(x2, params2, tile_q=64))
    ref2 = reference_forward(x2, params2)
    assert jnp.allclose(out2, ref2, atol=1e-3, rtol=1e-3), "tiled f32 mismatch"

    print("KERNEL_OK")
</pallas_src>

<mosaic_0001>
module attributes {stable_mosaic.version = 11 : i64} {
  func.func @kernel(%arg0: i32, %arg1: i32, %arg2: memref<1x8x32xf32, #tpu.memory_space<vmem>>, %arg3: memref<32x128xf32, #tpu.memory_space<vmem>>, %arg4: memref<32x256xf32, #tpu.memory_space<vmem>>, %arg5: memref<128x32xf32, #tpu.memory_space<vmem>>, %arg6: memref<32x96xf32, #tpu.memory_space<vmem>>, %arg7: memref<1x96xf32, #tpu.memory_space<vmem>>, %arg8: memref<96x32xf32, #tpu.memory_space<vmem>>, %arg9: memref<1x32xf32, #tpu.memory_space<vmem>>, %arg10: memref<1x32xf32, #tpu.memory_space<vmem>>, %arg11: memref<1x32xf32, #tpu.memory_space<vmem>>, %arg12: memref<1x32xf32, #tpu.memory_space<vmem>>, %arg13: memref<1x32xf32, #tpu.memory_space<vmem>>, %arg14: memref<1x8x32xf32, #tpu.memory_space<vmem>>, %arg15: memref<8x256xf32, #tpu.memory_space<vmem>>) attributes {dimension_semantics = [#tpu.dimension_semantics<parallel>, #tpu.dimension_semantics<arbitrary>], iteration_bounds = array<i64: 2, 1>, scalar_prefetch = 0 : i64, scratch_operands = 1 : i64, tpu.core_type = #tpu.core_type<tc>, window_params = [{transform_indices = @transform_0, window_bounds = array<i64: 1, 8, 32>}, {pipeline_mode = #tpu.pipeline_mode<synchronous>, transform_indices = @transform_1, window_bounds = array<i64: 32, 128>}, {pipeline_mode = #tpu.pipeline_mode<synchronous>, transform_indices = @transform_2, window_bounds = array<i64: 32, 256>}, {pipeline_mode = #tpu.pipeline_mode<synchronous>, transform_indices = @transform_3, window_bounds = array<i64: 128, 32>}, {pipeline_mode = #tpu.pipeline_mode<synchronous>, transform_indices = @transform_4, window_bounds = array<i64: 32, 96>}, {pipeline_mode = #tpu.pipeline_mode<synchronous>, transform_indices = @transform_5, window_bounds = array<i64: 1, 96>}, {pipeline_mode = #tpu.pipeline_mode<synchronous>, transform_indices = @transform_6, window_bounds = array<i64: 96, 32>}, {pipeline_mode = #tpu.pipeline_mode<synchronous>, transform_indices = @transform_7, window_bounds = array<i64: 1, 32>}, {pipeline_mode = #tpu.pipeline_mode<synchronous>, transform_indices = @transform_8, window_bounds = array<i64: 1, 32>}, {pipeline_mode = #tpu.pipeline_mode<synchronous>, transform_indices = @transform_9, window_bounds = array<i64: 1, 32>}, {pipeline_mode = #tpu.pipeline_mode<synchronous>, transform_indices = @transform_10, window_bounds = array<i64: 1, 32>}, {pipeline_mode = #tpu.pipeline_mode<synchronous>, transform_indices = @transform_11, window_bounds = array<i64: 1, 32>}, {transform_indices = @transform_12, window_bounds = array<i64: 1, 8, 32>}]} {
    %c0_i32 = arith.constant 0 : i32
    %0 = arith.cmpi eq, %arg1, %c0_i32 : i32
    %1 = arith.extui %0 : i1 to i32
    %c0_i32_0 = arith.constant 0 : i32
    %2 = arith.cmpi ne, %1, %c0_i32_0 : i32
    scf.if %2 {
      %c0_48 = arith.constant 0 : index
      %c0_49 = arith.constant 0 : index
      %c0_50 = arith.constant 0 : index
      %97 = vector.load %arg2[%c0_48, %c0_49, %c0_50] : memref<1x8x32xf32, #tpu.memory_space<vmem>>, vector<1x8x32xf32>
      %98 = vector.shape_cast %97 : vector<1x8x32xf32> to vector<8x32xf32>
      %c0_51 = arith.constant 0 : index
      %c0_52 = arith.constant 0 : index
      %99 = vector.load %arg4[%c0_51, %c0_52] : memref<32x256xf32, #tpu.memory_space<vmem>>, vector<32x256xf32>
      %cst_53 = arith.constant dense<0.000000e+00> : vector<8x256xf32>
      %100 = tpu.matmul %98, %99, %cst_53 {dimension_numbers = #tpu.dot_dimension_numbers<[1], [0], [0], [1], [0, 0, 1, 1], [], []>} : vector<8x32xf32>, vector<32x256xf32>, vector<8x256xf32> -> vector<8x256xf32>
      %c0_54 = arith.constant 0 : index
      %c0_55 = arith.constant 0 : index
      %101 = vector.load %arg15[%c0_54, %c0_55] : memref<8x256xf32, #tpu.memory_space<vmem>>, vector<8x256xf32>
      tpu.vector_store %arg15[%c0_54, %c0_55], %100 {strides = array<i32>} : memref<8x256xf32, #tpu.memory_space<vmem>>, vector<8x256xf32>,
    } else {
    }
    %c8_i32 = arith.constant 8 : i32
    %3 = arith.muli %arg1, %c8_i32 : i32
    %4 = tpu.assume_multiple %3, 8 : i32
    %c0 = arith.constant 0 : index
    %5 = arith.index_cast %4 : i32 to index
    %c0_1 = arith.constant 0 : index
    %6 = vector.load %arg2[%c0, %5, %c0_1] : memref<1x8x32xf32, #tpu.memory_space<vmem>>, vector<1x8x32xf32>
    %7 = vector.shape_cast %6 : vector<1x8x32xf32> to vector<8x32xf32>
    %c0_2 = arith.constant 0 : index
    %c0_3 = arith.constant 0 : index
    %8 = vector.load %arg3[%c0_2, %c0_3] : memref<32x128xf32, #tpu.memory_space<vmem>>, vector<32x128xf32>
    %cst = arith.constant dense<0.000000e+00> : vector<8x128xf32>
    %9 = tpu.matmul %7, %8, %cst {dimension_numbers = #tpu.dot_dimension_numbers<[1], [0], [0], [1], [0, 0, 1, 1], [], []>} : vector<8x32xf32>, vector<32x128xf32>, vector<8x128xf32> -> vector<8x128xf32>
    %c0_4 = arith.constant 0 : index
    %c0_5 = arith.constant 0 : index
    %10 = vector.load %arg15[%c0_4, %c0_5] : memref<8x256xf32, #tpu.memory_space<vmem>>, vector<8x128xf32>
    %c0_6 = arith.constant 0 : index
    %c128 = arith.constant 128 : index
    %11 = vector.load %arg15[%c0_6, %c128] : memref<8x256xf32, #tpu.memory_space<vmem>>, vector<8x128xf32>
    %cst_7 = arith.constant dense<0.000000e+00> : vector<8x8xf32>
    %12 = tpu.matmul %9, %10, %cst_7 {dimension_numbers = #tpu.dot_dimension_numbers<[1], [1], [0], [0], [0, 0, 1, 0], [], []>} : vector<8x128xf32>, vector<8x128xf32>, vector<8x8xf32> -> vector<8x8xf32>
    %cst_8 = arith.constant dense<0xFF800000> : vector<8xf32>
    %13 = vector.multi_reduction <maximumf>, %12, %cst_8 [1] : vector<8x8xf32> to vector<8xf32>
    %14 = vector.shape_cast %13 : vector<8xf32> to vector<8x1xf32>
    %15 = vector.broadcast %14 : vector<8x1xf32> to vector<8x8xf32>
    %16 = arith.subf %12, %15 : vector<8x8xf32>
    %17 = math.exp %16 : vector<8x8xf32>
    %cst_9 = arith.constant dense<0.000000e+00> : vector<8xf32>
    %18 = vector.multi_reduction <add>, %17, %cst_9 [1] : vector<8x8xf32> to vector<8xf32>
    %19 = vector.shape_cast %18 : vector<8xf32> to vector<8x1xf32>
    %cst_10 = arith.constant dense<0.000000e+00> : vector<8x128xf32>
    %20 = tpu.matmul %17, %11, %cst_10 {dimension_numbers = #tpu.dot_dimension_numbers<[1], [0], [0], [1], [0, 0, 1, 1], [], []>} : vector<8x8xf32>, vector<8x128xf32>, vector<8x128xf32> -> vector<8x128xf32>
    %21 = tpu.reciprocal %19 : vector<8x1xf32> -> vector<8x1xf32>
    %22 = vector.broadcast %21 : vector<8x1xf32> to vector<8x128xf32>
    %23 = arith.mulf %20, %22 : vector<8x128xf32>
    %c0_11 = arith.constant 0 : index
    %c0_12 = arith.constant 0 : index
    %24 = vector.load %arg5[%c0_11, %c0_12] : memref<128x32xf32, #tpu.memory_space<vmem>>, vector<128x32xf32>
    %cst_13 = arith.constant dense<0.000000e+00> : vector<8x32xf32>
    %25 = tpu.matmul %23, %24, %cst_13 {dimension_numbers = #tpu.dot_dimension_numbers<[1], [0], [0], [1], [0, 0, 1, 1], [], []>} : vector<8x128xf32>, vector<128x32xf32>, vector<8x32xf32> -> vector<8x32xf32>
    %26 = arith.addf %7, %25 : vector<8x32xf32>
    %c0_14 = arith.constant 0 : index
    %c0_15 = arith.constant 0 : index
    %27 = vector.load %arg10[%c0_14, %c0_15] : memref<1x32xf32, #tpu.memory_space<vmem>>, vector<1x32xf32>
    %c0_16 = arith.constant 0 : index
    %c0_17 = arith.constant 0 : index
    %28 = vector.load %arg11[%c0_16, %c0_17] : memref<1x32xf32, #tpu.memory_space<vmem>>, vector<1x32xf32>
    %cst_18 = arith.constant dense<0.000000e+00> : vector<8xf32>
    %29 = vector.multi_reduction <add>, %26, %cst_18 [1] : vector<8x32xf32> to vector<8xf32>
    %30 = vector.shape_cast %29 : vector<8xf32> to vector<8x1xf32>
    %cst_19 = arith.constant 3.200000e+01 : f32
    %31 = vector.broadcast %cst_19 : f32 to vector<8x1xf32>
    %32 = arith.divf %30, %31 : vector<8x1xf32>
    %33 = vector.broadcast %32 : vector<8x1xf32> to vector<8x32xf32>
    %34 = arith.subf %26, %33 : vector<8x32xf32>
    %35 = arith.mulf %34, %34 : vector<8x32xf32>
    %cst_20 = arith.constant dense<0.000000e+00> : vector<8xf32>
    %36 = vector.multi_reduction <add>, %35, %cst_20 [1] : vector<8x32xf32> to vector<8xf32>
    %37 = vector.shape_cast %36 : vector<8xf32> to vector<8x1xf32>
    %cst_21 = arith.constant 3.200000e+01 : f32
    %38 = vector.broadcast %cst_21 : f32 to vector<8x1xf32>
    %39 = arith.divf %37, %38 : vector<8x1xf32>
    %40 = vector.broadcast %32 : vector<8x1xf32> to vector<8x32xf32>
    %41 = arith.subf %26, %40 : vector<8x32xf32>
    %cst_22 = arith.constant 9.99999974E-6 : f32
    %42 = vector.broadcast %cst_22 : f32 to vector<8x1xf32>
    %43 = arith.addf %39, %42 : vector<8x1xf32>
    %44 = math.rsqrt %43 : vector<8x1xf32>
    %45 = vector.broadcast %44 : vector<8x1xf32> to vector<8x32xf32>
    %46 = arith.mulf %41, %45 : vector<8x32xf32>
    %47 = vector.broadcast %27 : vector<1x32xf32> to vector<8x32xf32>
    %48 = arith.mulf %46, %47 : vector<8x32xf32>
    %49 = vector.broadcast %28 : vector<1x32xf32> to vector<8x32xf32>
    %50 = arith.addf %48, %49 : vector<8x32xf32>
    %c0_23 = arith.constant 0 : index
    %c0_24 = arith.constant 0 : index
    %51 = vector.load %arg6[%c0_23, %c0_24] : memref<32x96xf32, #tpu.memory_space<vmem>>, vector<32x96xf32>
    %cst_25 = arith.constant dense<0.000000e+00> : vector<8x96xf32>
    %52 = tpu.matmul %50, %51, %cst_25 {dimension_numbers = #tpu.dot_dimension_numbers<[1], [0], [0], [1], [0, 0, 1, 1], [], []>} : vector<8x32xf32>, vector<32x96xf32>, vector<8x96xf32> -> vector<8x96xf32>
    %c0_26 = arith.constant 0 : index
    %c0_27 = arith.constant 0 : index
    %53 = vector.load %arg7[%c0_26, %c0_27] : memref<1x96xf32, #tpu.memory_space<vmem>>, vector<1x96xf32>
    %54 = vector.broadcast %53 : vector<1x96xf32> to vector<8x96xf32>
    %55 = arith.addf %52, %54 : vector<8x96xf32>
    %cst_28 = arith.constant 5.000000e-01 : f32
    %56 = vector.broadcast %cst_28 : f32 to vector<8x96xf32>
    %57 = arith.mulf %56, %55 : vector<8x96xf32>
    %cst_29 = arith.constant 0.707106769 : f32
    %58 = vector.broadcast %cst_29 : f32 to vector<8x96xf32>
    %59 = arith.mulf %55, %58 : vector<8x96xf32>
    %60 = math.erf %59 : vector<8x96xf32>
    %cst_30 = arith.constant 1.000000e+00 : f32
    %61 = vector.broadcast %cst_30 : f32 to vector<8x96xf32>
    %62 = arith.addf %61, %60 : vector<8x96xf32>
    %63 = arith.mulf %57, %62 : vector<8x96xf32>
    %c0_31 = arith.constant 0 : index
    %c0_32 = arith.constant 0 : index
    %64 = vector.load %arg8[%c0_31, %c0_32] : memref<96x32xf32, #tpu.memory_space<vmem>>, vector<96x32xf32>
    %cst_33 = arith.constant dense<0.000000e+00> : vector<8x32xf32>
    %65 = tpu.matmul %63, %64, %cst_33 {dimension_numbers = #tpu.dot_dimension_numbers<[1], [0], [0], [1], [0, 0, 1, 1], [], []>} : vector<8x96xf32>, vector<96x32xf32>, vector<8x32xf32> -> vector<8x32xf32>
    %c0_34 = arith.constant 0 : index
    %c0_35 = arith.constant 0 : index
    %66 = vector.load %arg9[%c0_34, %c0_35] : memref<1x32xf32, #tpu.memory_space<vmem>>, vector<1x32xf32>
    %67 = vector.broadcast %66 : vector<1x32xf32> to vector<8x32xf32>
    %68 = arith.addf %65, %67 : vector<8x32xf32>
    %69 = arith.addf %50, %68 : vector<8x32xf32>
    %c0_36 = arith.constant 0 : index
    %c0_37 = arith.constant 0 : index
    %70 = vector.load %arg12[%c0_36, %c0_37] : memref<1x32xf32, #tpu.memory_space<vmem>>, vector<1x32xf32>
    %c0_38 = arith.constant 0 : index
    %c0_39 = arith.constant 0 : index
    %71 = vector.load %arg13[%c0_38, %c0_39] : memref<1x32xf32, #tpu.memory_space<vmem>>, vector<1x32xf32>
    %cst_40 = arith.constant dense<0.000000e+00> : vector<8xf32>
    %72 = vector.multi_reduction <add>, %69, %cst_40 [1] : vector<8x32xf32> to vector<8xf32>
    %73 = vector.shape_cast %72 : vector<8xf32> to vector<8x1xf32>
    %cst_41 = arith.constant 3.200000e+01 : f32
    %74 = vector.broadcast %cst_41 : f32 to vector<8x1xf32>
    %75 = arith.divf %73, %74 : vector<8x1xf32>
    %76 = vector.broadcast %75 : vector<8x1xf32> to vector<8x32xf32>
    %77 = arith.subf %69, %76 : vector<8x32xf32>
    %78 = arith.mulf %77, %77 : vector<8x32xf32>
    %cst_42 = arith.constant dense<0.000000e+00> : vector<8xf32>
    %79 = vector.multi_reduction <add>, %78, %cst_42 [1] : vector<8x32xf32> to vector<8xf32>
    %80 = vector.shape_cast %79 : vector<8xf32> to vector<8x1xf32>
    %cst_43 = arith.constant 3.200000e+01 : f32
    %81 = vector.broadcast %cst_43 : f32 to vector<8x1xf32>
    %82 = arith.divf %80, %81 : vector<8x1xf32>
    %83 = vector.broadcast %75 : vector<8x1xf32> to vector<8x32xf32>
    %84 = arith.subf %69, %83 : vector<8x32xf32>
    %cst_44 = arith.constant 9.99999974E-6 : f32
    %85 = vector.broadcast %cst_44 : f32 to vector<8x1xf32>
    %86 = arith.addf %82, %85 : vector<8x1xf32>
    %87 = math.rsqrt %86 : vector<8x1xf32>
    %88 = vector.broadcast %87 : vector<8x1xf32> to vector<8x32xf32>
    %89 = arith.mulf %84, %88 : vector<8x32xf32>
    %90 = vector.broadcast %70 : vector<1x32xf32> to vector<8x32xf32>
    %91 = arith.mulf %89, %90 : vector<8x32xf32>
    %92 = vector.broadcast %71 : vector<1x32xf32> to vector<8x32xf32>
    %93 = arith.addf %91, %92 : vector<8x32xf32>
    %c0_45 = arith.constant 0 : index
    %c0_46 = arith.constant 0 : index
    %c0_47 = arith.constant 0 : index
    %94 = vector.load %arg14[%c0_45, %c0_46, %c0_47] : memref<1x8x32xf32, #tpu.memory_space<vmem>>, vector<1x8x32xf32>
    %95 = vector.shape_cast %94 : vector<1x8x32xf32> to vector<8x32xf32>
    %96 = vector.shape_cast %93 : vector<8x32xf32> to vector<1x8x32xf32>
    tpu.vector_store %arg14[%c0_45, %c0_46, %c0_47], %96 {strides = array<i32>} : memref<1x8x32xf32, #tpu.memory_space<vmem>>, vector<1x8x32xf32>,
    return
  }
  func.func @transform_0(%arg0: i32, %arg1: i32) -> (i32, i32, i32) {
    %c0_i32 = arith.constant 0 : i32
    %c0_i32_0 = arith.constant 0 : i32
    %c0_i32_1 = arith.constant 0 : i32
    return %arg0, %c0_i32, %c0_i32_0 : i32, i32, i32
  }
  func.func @transform_1(%arg0: i32, %arg1: i32) -> (i32, i32) {
    %c0_i32 = arith.constant 0 : i32
    %c0_i32_0 = arith.constant 0 : i32
    %c0_i32_1 = arith.constant 0 : i32
    return %c0_i32, %c0_i32_0 : i32, i32
  }
  func.func @transform_2(%arg0: i32, %arg1: i32) -> (i32, i32) {
    %c0_i32 = arith.constant 0 : i32
    %c0_i32_0 = arith.constant 0 : i32
    %c0_i32_1 = arith.constant 0 : i32
    return %c0_i32, %c0_i32_0 : i32, i32
  }
  func.func @transform_3(%arg0: i32, %arg1: i32) -> (i32, i32) {
    %c0_i32 = arith.constant 0 : i32
    %c0_i32_0 = arith.constant 0 : i32
    %c0_i32_1 = arith.constant 0 : i32
    return %c0_i32, %c0_i32_0 : i32, i32
  }
  func.func @transform_4(%arg0: i32, %arg1: i32) -> (i32, i32) {
    %c0_i32 = arith.constant 0 : i32
    %c0_i32_0 = arith.constant 0 : i32
    %c0_i32_1 = arith.constant 0 : i32
    return %c0_i32, %c0_i32_0 : i32, i32
  }
  func.func @transform_5(%arg0: i32, %arg1: i32) -> (i32, i32) {
    %c0_i32 = arith.constant 0 : i32
    %c0_i32_0 = arith.constant 0 : i32
    %c0_i32_1 = arith.constant 0 : i32
    return %c0_i32, %c0_i32_0 : i32, i32
  }
  func.func @transform_6(%arg0: i32, %arg1: i32) -> (i32, i32) {
    %c0_i32 = arith.constant 0 : i32
    %c0_i32_0 = arith.constant 0 : i32
    %c0_i32_1 = arith.constant 0 : i32
    return %c0_i32, %c0_i32_0 : i32, i32
  }
  func.func @transform_7(%arg0: i32, %arg1: i32) -> (i32, i32) {
    %c0_i32 = arith.constant 0 : i32
    %c0_i32_0 = arith.constant 0 : i32
    %c0_i32_1 = arith.constant 0 : i32
    return %c0_i32, %c0_i32_0 : i32, i32
  }
  func.func @transform_8(%arg0: i32, %arg1: i32) -> (i32, i32) {
    %c0_i32 = arith.constant 0 : i32
    %c0_i32_0 = arith.constant 0 : i32
    %c0_i32_1 = arith.constant 0 : i32
    return %c0_i32, %c0_i32_0 : i32, i32
  }
  func.func @transform_9(%arg0: i32, %arg1: i32) -> (i32, i32) {
    %c0_i32 = arith.constant 0 : i32
    %c0_i32_0 = arith.constant 0 : i32
    %c0_i32_1 = arith.constant 0 : i32
    return %c0_i32, %c0_i32_0 : i32, i32
  }
  func.func @transform_10(%arg0: i32, %arg1: i32) -> (i32, i32) {
    %c0_i32 = arith.constant 0 : i32
    %c0_i32_0 = arith.constant 0 : i32
    %c0_i32_1 = arith.constant 0 : i32
    return %c0_i32, %c0_i32_0 : i32, i32
  }
  func.func @transform_11(%arg0: i32, %arg1: i32) -> (i32, i32) {
    %c0_i32 = arith.constant 0 : i32
    %c0_i32_0 = arith.constant 0 : i32
    %c0_i32_1 = arith.constant 0 : i32
    return %c0_i32, %c0_i32_0 : i32, i32
  }
  func.func @transform_12(%arg0: i32, %arg1: i32) -> (i32, i32, i32) {
    %c0_i32 = arith.constant 0 : i32
    %c0_i32_0 = arith.constant 0 : i32
    return %arg0, %arg1, %c0_i32 : i32, i32, i32
  }
}

</mosaic_0001>

<llo_original>
// kernel: tpu_custom_call.1
$region0: #{tpu_custom_call.1}
  #allocation0 [shape = 'u32[]', space=smem, size = 0x4, offset = 0x4, fixed_abs, tag = 'smem constant byte address 0x4 - core index']
  #allocation1 [shape = 'u32[144,128]{1,0:T(1,128)}', space=vmem, size = 0x12000, scoped, tag = 'internal scratch']
  #allocation2 [shape = 'f32[8,256]{1,0:T(8,128)}', space=vmem, size = 0x2000, scoped, tag = 'scratch operand']
  %s0 = inlined_call_operand.vmem [shape: f32[2,8,32], index: 0, kind: input, shape index: {}]
  %s1 = inlined_call_operand.vmem [shape: f32[32,128], index: 1, kind: input, shape index: {}]
  %s2 = inlined_call_operand.vmem [shape: f32[32,256], index: 2, kind: input, shape index: {}]
  %s3 = inlined_call_operand.vmem [shape: f32[128,32], index: 3, kind: input, shape index: {}]
  %s4 = inlined_call_operand.vmem [shape: f32[32,96], index: 4, kind: input, shape index: {}]
  %s5 = inlined_call_operand.vmem [shape: f32[1,96], index: 5, kind: input, shape index: {}]
  %s6 = inlined_call_operand.vmem [shape: f32[96,32], index: 6, kind: input, shape index: {}]
  %s7 = inlined_call_operand.vmem [shape: f32[1,32], index: 7, kind: input, shape index: {}]
  %s8 = inlined_call_operand.vmem [shape: f32[1,32], index: 8, kind: input, shape index: {}]
  %s9 = inlined_call_operand.vmem [shape: f32[1,32], index: 9, kind: input, shape index: {}]
  %s10 = inlined_call_operand.vmem [shape: f32[1,32], index: 10, kind: input, shape index: {}]
  %s11 = inlined_call_operand.vmem [shape: f32[1,32], index: 11, kind: input, shape index: {}]
  %s12 = inlined_call_operand.hbm [shape: f32[2,8,32], index: 12, kind: output, shape index: {}]
  %s13 = sld [smem:[#allocation0]]
  $region85: #{tpu_custom_call.1} parent=0
    _
  %s15 = ssub.s32 1, %s13
  %s16 = scalar_select 0, %s15, %s13
  $region1: #{tpu_custom_call.1} parent=0
    #allocation3 [shape = 'u8[8192]{0}', space=vmem, size = 0x2000, scoped, tag = 'output window, operand 0']
    #allocation4 [shape = 's32[2]{0}', space=sflag, size = 0x8, scoped, tag = 'scoped memory for tpu_custom_call.1']
    %17 = vsyncpa [#allocation4], 0
    %s18 = scalar_lea.sflag [#allocation4], 1
    %19 = vsyncpa %s18, 0
    loop: start=0, step=1, limit=4
    $region2: #{tpu_custom_call.1} parent=1 // loop_pre_header
      _
    $region3: #{tpu_custom_call.1} parent=1 // loop_header
      %s21 = sphi 0, %s25
      %p22 = scmp.ge.s32.totalorder %s21, 4
      %s28 = sphi 0, %s40
      %s29 = sphi 0, %s36
      %s30 = sphi 0, %s28
      %s31 = sphi 0, %s29
      %s32 = sphi 0, %s30
      %s33 = sphi 0, %s31
      %s43 = sphi 0, %s45
      %s46 = sphi 0, %s43
      %s47 = sphi 0, %s46
      %s63 = sphi 0, %s47
      %s67 = sphi 0, %s67
      %s69 = sphi 0, %s67
      %s70 = sphi 0, %s69
      %s84 = sphi 0, %s70
      %s88 = sphi 0, %s88
      %s90 = sphi 0, %s88
      %s91 = sphi 0, %s90
      %s105 = sphi 0, %s91
      %s109 = sphi 0, %s109
      %s111 = sphi 0, %s109
      %s112 = sphi 0, %s111
      %s126 = sphi 0, %s112
      %s130 = sphi 0, %s130
      %s132 = sphi 0, %s130
      %s133 = sphi 0, %s132
      %s147 = sphi 0, %s133
      %s151 = sphi 0, %s151
      %s153 = sphi 0, %s151
      %s154 = sphi 0, %s153
      %s168 = sphi 0, %s154
      %s172 = sphi 0, %s172
      %s174 = sphi 0, %s172
      %s175 = sphi 0, %s174
      %s189 = sphi 0, %s175
      %s193 = sphi 0, %s193
      %s195 = sphi 0, %s193
      %s196 = sphi 0, %s195
      %s210 = sphi 0, %s196
      %s214 = sphi 0, %s214
      %s216 = sphi 0, %s214
      %s217 = sphi 0, %s216
      %s231 = sphi 0, %s217
      %s235 = sphi 0, %s235
      %s237 = sphi 0, %s235
      %s238 = sphi 0, %s237
      %s252 = sphi 0, %s238
      %s256 = sphi 0, %s256
      %s258 = sphi 0, %s256
      %s259 = sphi 0, %s258
      %s273 = sphi 0, %s259
      %s277 = sphi 0, %s277
      %s279 = sphi 0, %s277
      %s280 = sphi 0, %s279
      %s294 = sphi 0, %s280
      %s302 = sphi 0, %s304
      %s305 = sphi 0, %s302
      %s306 = sphi 0, %s305
      %s322 = sphi 0, %s306
    $region4: #{tpu_custom_call.1} parent=1 // loop_header_branch
      %24 = sbr.rel (%p22) target = $region8
    $region5: #{tpu_custom_call.1} parent=1 // loop_body
      %s26 = ssub.s32 %s21, 1
      %s27 = ssub.s32 %s21, 2
      %s34 = sadd.s32 1, %s29
      %p35 = scmp.ge.s32.totalorder %s34, 1
      %s36 = scalar_select %p35, 0, %s34
      %s37 = sadd.s32 1, %s28
      %s38 = scalar_select %p35, %s37, %s28
      %p39 = scmp.ge.s32.totalorder %s38, 2
      %s40 = scalar_select %p39, 0, %s38
      %s41 = ssub.s32 %s28, %s40
      %p42 = scmp.eq.s32.totalorder %s41, 0
      %s44 = sadd.s32 %s43, 1
      %s45 = scalar_select %p42, %s43, %s44
      %p48 = pneg %p42
      %p49 = scmp.eq.s32.totalorder %s21, 1
      %p50 = por %p48, %p49
      %p51 = scmp.ne.s32.totalorder %s43, %s46
      %p52 = scmp.eq.s32.totalorder %s21, 0
      %p53 = por %p51, %p52
      %p54 = scmp.ne.s32.totalorder %s43, %s46
      %p55 = scmp.eq.s32.totalorder %s26, 1
      %p56 = por %p54, %p55
      %p57 = scmp.ne.s32.totalorder %s46, %s47
      %p58 = scmp.eq.s32.totalorder %s26, 0
      %p59 = por %p57, %p58
      %p60 = scmp.ne.s32.totalorder %s46, %s47
      %p61 = scmp.eq.s32.totalorder %s27, 1
      %p62 = por %p60, %p61
      %p64 = scmp.ne.s32.totalorder %s47, %s63
      %p65 = scmp.eq.s32.totalorder %s27, 0
      %p66 = por %p64, %p65
      %s68 = sadd.s32 %s67, 1
      %p71 = scmp.eq.s32.totalorder %s21, 1
      %p72 = scmp.ne.s32.totalorder %s67, %s69
      %p73 = scmp.eq.s32.totalorder %s21, 0
      %p74 = por %p72, %p73
      %p75 = scmp.ne.s32.totalorder %s67, %s69
      %p76 = scmp.eq.s32.totalorder %s26, 1
      %p77 = por %p75, %p76
      %p78 = scmp.ne.s32.totalorder %s69, %s70
      %p79 = scmp.eq.s32.totalorder %s26, 0
      %p80 = por %p78, %p79
      %p81 = scmp.ne.s32.totalorder %s69, %s70
      %p82 = scmp.eq.s32.totalorder %s27, 1
      %p83 = por %p81, %p82
      %p85 = scmp.ne.s32.totalorder %s70, %s84
      %p86 = scmp.eq.s32.totalorder %s27, 0
      %p87 = por %p85, %p86
      %s89 = sadd.s32 %s88, 1
      %p92 = scmp.eq.s32.totalorder %s21, 1
      %p93 = scmp.ne.s32.totalorder %s88, %s90
      %p94 = scmp.eq.s32.totalorder %s21, 0
      %p95 = por %p93, %p94
      %p96 = scmp.ne.s32.totalorder %s88, %s90
      %p97 = scmp.eq.s32.totalorder %s26, 1
      %p98 = por %p96, %p97
      %p99 = scmp.ne.s32.totalorder %s90, %s91
      %p100 = scmp.eq.s32.totalorder %s26, 0
      %p101 = por %p99, %p100
      %p102 = scmp.ne.s32.totalorder %s90, %s91
      %p103 = scmp.eq.s32.totalorder %s27, 1
      %p104 = por %p102, %p103
      %p106 = scmp.ne.s32.totalorder %s91, %s105
      %p107 = scmp.eq.s32.totalorder %s27, 0
      %p108 = por %p106, %p107
      %s110 = sadd.s32 %s109, 1
      %p113 = scmp.eq.s32.totalorder %s21, 1
      %p114 = scmp.ne.s32.totalorder %s109, %s111
      %p115 = scmp.eq.s32.totalorder %s21, 0
      %p116 = por %p114, %p115
      %p117 = scmp.ne.s32.totalorder %s109, %s111
      %p118 = scmp.eq.s32.totalorder %s26, 1
      %p119 = por %p117, %p118
      %p120 = scmp.ne.s32.totalorder %s111, %s112
      %p121 = scmp.eq.s32.totalorder %s26, 0
      %p122 = por %p120, %p121
      %p123 = scmp.ne.s32.totalorder %s111, %s112
      %p124 = scmp.eq.s32.totalorder %s27, 1
      %p125 = por %p123, %p124
      %p127 = scmp.ne.s32.totalorder %s112, %s126
      %p128 = scmp.eq.s32.totalorder %s27, 0
      %p129 = por %p127, %p128
      %s131 = sadd.s32 %s130, 1
      %p134 = scmp.eq.s32.totalorder %s21, 1
      %p135 = scmp.ne.s32.totalorder %s130, %s132
      %p136 = scmp.eq.s32.totalorder %s21, 0
      %p137 = por %p135, %p136
      %p138 = scmp.ne.s32.totalorder %s130, %s132
      %p139 = scmp.eq.s32.totalorder %s26, 1
      %p140 = por %p138, %p139
      %p141 = scmp.ne.s32.totalorder %s132, %s133
      %p142 = scmp.eq.s32.totalorder %s26, 0
      %p143 = por %p141, %p142
      %p144 = scmp.ne.s32.totalorder %s132, %s133
      %p145 = scmp.eq.s32.totalorder %s27, 1
      %p146 = por %p144, %p145
      %p148 = scmp.ne.s32.totalorder %s133, %s147
      %p149 = scmp.eq.s32.totalorder %s27, 0
      %p150 = por %p148, %p149
      %s152 = sadd.s32 %s151, 1
      %p155 = scmp.eq.s32.totalorder %s21, 1
      %p156 = scmp.ne.s32.totalorder %s151, %s153
      %p157 = scmp.eq.s32.totalorder %s21, 0
      %p158 = por %p156, %p157
      %p159 = scmp.ne.s32.totalorder %s151, %s153
      %p160 = scmp.eq.s32.totalorder %s26, 1
      %p161 = por %p159, %p160
      %p162 = scmp.ne.s32.totalorder %s153, %s154
      %p163 = scmp.eq.s32.totalorder %s26, 0
      %p164 = por %p162, %p163
      %p165 = scmp.ne.s32.totalorder %s153, %s154
      %p166 = scmp.eq.s32.totalorder %s27, 1
      %p167 = por %p165, %p166
      %p169 = scmp.ne.s32.totalorder %s154, %s168
      %p170 = scmp.eq.s32.totalorder %s27, 0
      %p171 = por %p169, %p170
      %s173 = sadd.s32 %s172, 1
      %p176 = scmp.eq.s32.totalorder %s21, 1
      %p177 = scmp.ne.s32.totalorder %s172, %s174
      %p178 = scmp.eq.s32.totalorder %s21, 0
      %p179 = por %p177, %p178
      %p180 = scmp.ne.s32.totalorder %s172, %s174
      %p181 = scmp.eq.s32.totalorder %s26, 1
      %p182 = por %p180, %p181
      %p183 = scmp.ne.s32.totalorder %s174, %s175
      %p184 = scmp.eq.s32.totalorder %s26, 0
      %p185 = por %p183, %p184
      %p186 = scmp.ne.s32.totalorder %s174, %s175
      %p187 = scmp.eq.s32.totalorder %s27, 1
      %p188 = por %p186, %p187
      %p190 = scmp.ne.s32.totalorder %s175, %s189
      %p191 = scmp.eq.s32.totalorder %s27, 0
      %p192 = por %p190, %p191
      %s194 = sadd.s32 %s193, 1
      %p197 = scmp.eq.s32.totalorder %s21, 1
      %p198 = scmp.ne.s32.totalorder %s193, %s195
      %p199 = scmp.eq.s32.totalorder %s21, 0
      %p200 = por %p198, %p199
      %p201 = scmp.ne.s32.totalorder %s193, %s195
      %p202 = scmp.eq.s32.totalorder %s26, 1
      %p203 = por %p201, %p202
      %p204 = scmp.ne.s32.totalorder %s195, %s196
      %p205 = scmp.eq.s32.totalorder %s26, 0
      %p206 = por %p204, %p205
      %p207 = scmp.ne.s32.totalorder %s195, %s196
      %p208 = scmp.eq.s32.totalorder %s27, 1
      %p209 = por %p207, %p208
      %p211 = scmp.ne.s32.totalorder %s196, %s210
      %p212 = scmp.eq.s32.totalorder %s27, 0
      %p213 = por %p211, %p212
      %s215 = sadd.s32 %s214, 1
      %p218 = scmp.eq.s32.totalorder %s21, 1
      %p219 = scmp.ne.s32.totalorder %s214, %s216
      %p220 = scmp.eq.s32.totalorder %s21, 0
      %p221 = por %p219, %p220
      %p222 = scmp.ne.s32.totalorder %s214, %s216
      %p223 = scmp.eq.s32.totalorder %s26, 1
      %p224 = por %p222, %p223
      %p225 = scmp.ne.s32.totalorder %s216, %s217
      %p226 = scmp.eq.s32.totalorder %s26, 0
      %p227 = por %p225, %p226
      %p228 = scmp.ne.s32.totalorder %s216, %s217
      %p229 = scmp.eq.s32.totalorder %s27, 1
      %p230 = por %p228, %p229
      %p232 = scmp.ne.s32.totalorder %s217, %s231
      %p233 = scmp.eq.s32.totalorder %s27, 0
      %p234 = por %p232, %p233
      %s236 = sadd.s32 %s235, 1
      %p239 = scmp.eq.s32.totalorder %s21, 1
      %p240 = scmp.ne.s32.totalorder %s235, %s237
      %p241 = scmp.eq.s32.totalorder %s21, 0
      %p242 = por %p240, %p241
      %p243 = scmp.ne.s32.totalorder %s235, %s237
      %p244 = scmp.eq.s32.totalorder %s26, 1
      %p245 = por %p243, %p244
      %p246 = scmp.ne.s32.totalorder %s237, %s238
      %p247 = scmp.eq.s32.totalorder %s26, 0
      %p248 = por %p246, %p247
      %p249 = scmp.ne.s32.totalorder %s237, %s238
      %p250 = scmp.eq.s32.totalorder %s27, 1
      %p251 = por %p249, %p250
      %p253 = scmp.ne.s32.totalorder %s238, %s252
      %p254 = scmp.eq.s32.totalorder %s27, 0
      %p255 = por %p253, %p254
      %s257 = sadd.s32 %s256, 1
      %p260 = scmp.eq.s32.totalorder %s21, 1
      %p261 = scmp.ne.s32.totalorder %s256, %s258
      %p262 = scmp.eq.s32.totalorder %s21, 0
      %p263 = por %p261, %p262
      %p264 = scmp.ne.s32.totalorder %s256, %s258
      %p265 = scmp.eq.s32.totalorder %s26, 1
      %p266 = por %p264, %p265
      %p267 = scmp.ne.s32.totalorder %s258, %s259
      %p268 = scmp.eq.s32.totalorder %s26, 0
      %p269 = por %p267, %p268
      %p270 = scmp.ne.s32.totalorder %s258, %s259
      %p271 = scmp.eq.s32.totalorder %s27, 1
      %p272 = por %p270, %p271
      %p274 = scmp.ne.s32.totalorder %s259, %s273
      %p275 = scmp.eq.s32.totalorder %s27, 0
      %p276 = por %p274, %p275
      %s278 = sadd.s32 %s277, 1
      %p281 = scmp.eq.s32.totalorder %s21, 1
      %p282 = scmp.ne.s32.totalorder %s277, %s279
      %p283 = scmp.eq.s32.totalorder %s21, 0
      %p284 = por %p282, %p283
      %p285 = scmp.ne.s32.totalorder %s277, %s279
      %p286 = scmp.eq.s32.totalorder %s26, 1
      %p287 = por %p285, %p286
      %p288 = scmp.ne.s32.totalorder %s279, %s280
      %p289 = scmp.eq.s32.totalorder %s26, 0
      %p290 = por %p288, %p289
      %p291 = scmp.ne.s32.totalorder %s279, %s280
      %p292 = scmp.eq.s32.totalorder %s27, 1
      %p293 = por %p291, %p292
      %p295 = scmp.ne.s32.totalorder %s280, %s294
      %p296 = scmp.eq.s32.totalorder %s27, 0
      %p297 = por %p295, %p296
      %s298 = ssub.s32 %s28, %s40
      %s299 = ssub.s32 %s29, %s36
      %s300 = sor.u32 %s298, %s299
      %p301 = scmp.eq.s32.totalorder %s300, 0
      %s303 = sadd.s32 %s302, 1
      %s304 = scalar_select %p301, %s302, %s303
      %p307 = pneg %p301
      %p308 = scmp.eq.s32.totalorder %s21, 1
      %p309 = por %p307, %p308
      %p310 = scmp.ne.s32.totalorder %s302, %s305
      %p311 = scmp.eq.s32.totalorder %s21, 0
      %p312 = por %p310, %p311
      %p313 = scmp.ne.s32.totalorder %s302, %s305
      %p314 = scmp.eq.s32.totalorder %s26, 1
      %p315 = por %p313, %p314
      %p316 = scmp.ne.s32.totalorder %s305, %s306
      %p317 = scmp.eq.s32.totalorder %s26, 0
      %p318 = por %p316, %p317
      %p319 = scmp.ne.s32.totalorder %s305, %s306
      %p320 = scmp.eq.s32.totalorder %s27, 1
      %p321 = por %p319, %p320
      %p323 = scmp.ne.s32.totalorder %s306, %s322
      %p324 = scmp.eq.s32.totalorder %s27, 0
      %p325 = por %p323, %p324
      %p326 = scmp.le.s32.totalorder 1, %s21
      %p327 = scmp.lt.s32.totalorder %s21, 3
      %p328 = pnand %p326, %p327
      %p329 = pneg %p328
      // Predicated region
      $region9: #{tpu_custom_call.1} parent=5 // pred_check
        _
      $region10: #{tpu_custom_call.1} parent=5 // pred_check_branch
        %331 = sbr.rel (%p328) target = $region12
      $region11: #{tpu_custom_call.1} parent=5 // pred_region
        %s332 = ssub.s32 %s21, 1
        // Predicated region
        $region13: #{tpu_custom_call.1} parent=11 // pred_check
          %p333 = pneg %p80
        $region14: #{tpu_custom_call.1} parent=11 // pred_check_branch
          %335 = sbr.rel (%p333) target = $region16
        $region15: #{tpu_custom_call.1} parent=11 // pred_region
          _
        $region16: #{tpu_custom_call.1} parent=11 // pred_fallthru
          _
        // Predicated region
        $region17: #{tpu_custom_call.1} parent=11 // pred_check
          %p336 = pneg %p101
        $region18: #{tpu_custom_call.1} parent=11 // pred_check_branch
          %338 = sbr.rel (%p336) target = $region20
        $region19: #{tpu_custom_call.1} parent=11 // pred_region
          _
        $region20: #{tpu_custom_call.1} parent=11 // pred_fallthru
          _
        // Predicated region
        $region21: #{tpu_custom_call.1} parent=11 // pred_check
          %p339 = pneg %p122
        $region22: #{tpu_custom_call.1} parent=11 // pred_check_branch
          %341 = sbr.rel (%p339) target = $region24
        $region23: #{tpu_custom_call.1} parent=11 // pred_region
          _
        $region24: #{tpu_custom_call.1} parent=11 // pred_fallthru
          _
        // Predicated region
        $region25: #{tpu_custom_call.1} parent=11 // pred_check
          %p342 = pneg %p143
        $region26: #{tpu_custom_call.1} parent=11 // pred_check_branch
          %344 = sbr.rel (%p342) target = $region28
        $region27: #{tpu_custom_call.1} parent=11 // pred_region
          _
        $region28: #{tpu_custom_call.1} parent=11 // pred_fallthru
          _
        // Predicated region
        $region29: #{tpu_custom_call.1} parent=11 // pred_check
          %p345 = pneg %p164
        $region30: #{tpu_custom_call.1} parent=11 // pred_check_branch
          %347 = sbr.rel (%p345) target = $region32
        $region31: #{tpu_custom_call.1} parent=11 // pred_region
          _
        $region32: #{tpu_custom_call.1} parent=11 // pred_fallthru
          _
        // Predicated region
        $region33: #{tpu_custom_call.1} parent=11 // pred_check
          %p348 = pneg %p185
        $region34: #{tpu_custom_call.1} parent=11 // pred_check_branch
          %350 = sbr.rel (%p348) target = $region36
        $region35: #{tpu_custom_call.1} parent=11 // pred_region
          _
        $region36: #{tpu_custom_call.1} parent=11 // pred_fallthru
          _
        // Predicated region
        $region37: #{tpu_custom_call.1} parent=11 // pred_check
          %p351 = pneg %p206
        $region38: #{tpu_custom_call.1} parent=11 // pred_check_branch
          %353 = sbr.rel (%p351) target = $region40
        $region39: #{tpu_custom_call.1} parent=11 // pred_region
          _
        $region40: #{tpu_custom_call.1} parent=11 // pred_fallthru
          _
        // Predicated region
        $region41: #{tpu_custom_call.1} parent=11 // pred_check
          %p354 = pneg %p227
        $region42: #{tpu_custom_call.1} parent=11 // pred_check_branch
          %356 = sbr.rel (%p354) target = $region44
        $region43: #{tpu_custom_call.1} parent=11 // pred_region
          _
        $region44: #{tpu_custom_call.1} parent=11 // pred_fallthru
          _
        // Predicated region
        $region45: #{tpu_custom_call.1} parent=11 // pred_check
          %p357 = pneg %p248
        $region46: #{tpu_custom_call.1} parent=11 // pred_check_branch
          %359 = sbr.rel (%p357) target = $region48
        $region47: #{tpu_custom_call.1} parent=11 // pred_region
          _
        $region48: #{tpu_custom_call.1} parent=11 // pred_fallthru
          _
        // Predicated region
        $region49: #{tpu_custom_call.1} parent=11 // pred_check
          %p360 = pneg %p269
        $region50: #{tpu_custom_call.1} parent=11 // pred_check_branch
          %362 = sbr.rel (%p360) target = $region52
        $region51: #{tpu_custom_call.1} parent=11 // pred_region
          _
        $region52: #{tpu_custom_call.1} parent=11 // pred_fallthru
          _
        // Predicated region
        $region53: #{tpu_custom_call.1} parent=11 // pred_check
          %p363 = pneg %p290
        $region54: #{tpu_custom_call.1} parent=11 // pred_check_branch
          %365 = sbr.rel (%p363) target = $region56
        $region55: #{tpu_custom_call.1} parent=11 // pred_region
          _
        $region56: #{tpu_custom_call.1} parent=11 // pred_fallthru
          _
      $region12: #{tpu_custom_call.1} parent=5 // pred_fallthru
        _
      %p366 = scmp.lt.s32.totalorder %s21, 2
      // Predicated region
      $region57: #{tpu_custom_call.1} parent=5 // pred_check
        %p367 = pneg %p366
      $region58: #{tpu_custom_call.1} parent=5 // pred_check_branch
        %369 = sbr.rel (%p367) target = $region60
      $region59: #{tpu_custom_call.1} parent=5 // pred_region
        // Predicated region
        $region61: #{tpu_custom_call.1} parent=59 // pred_check
          %p370 = pneg %p53
        $region62: #{tpu_custom_call.1} parent=59 // pred_check_branch
          %372 = sbr.rel (%p370) target = $region64
        $region63: #{tpu_custom_call.1} parent=59 // pred_region
          %p373 = scmp.lt.s32.totalorder %s28, 1
          %s374 = scalar_select %p373, %s28, 1
          %s375 = smul.addr %s374, 8
          %s376 = scalar_lea.vmem %s0, %s375
        $region64: #{tpu_custom_call.1} parent=59 // pred_fallthru
          _
      $region60: #{tpu_custom_call.1} parent=5 // pred_fallthru
        _
      %p377 = scmp.le.s32.totalorder 1, %s21
      %p378 = scmp.lt.s32.totalorder %s21, 3
      %p379 = pnand %p377, %p378
      %p380 = pneg %p379
      // Predicated region
      $region65: #{tpu_custom_call.1} parent=5 // pred_check
        _
      $region66: #{tpu_custom_call.1} parent=5 // pred_check_branch
        %382 = sbr.rel (%p379) target = $region68
      $region67: #{tpu_custom_call.1} parent=5 // pred_region
        %s383 = ssub.s32 %s21, 1
        %p384 = scmp.lt.s32.totalorder %s30, 1
        %s385 = scalar_select %p384, %s30, 1
        %s386 = smul.addr %s385, 8
        %s387 = scalar_lea.vmem %s0, %s386
        %p388 = pneg %p59
        %p389 = pneg %p56
        %p390 = pneg %p80
        %p391 = pneg %p77
        %p392 = pneg %p101
        %p393 = pneg %p98
        %p394 = pneg %p122
        %p395 = pneg %p119
        %p396 = pneg %p143
        %p397 = pneg %p140
        %p398 = pneg %p164
        %p399 = pneg %p161
        %p400 = pneg %p185
        %p401 = pneg %p182
        %p402 = pneg %p206
        %p403 = pneg %p203
        %p404 = pneg %p227
        %p405 = pneg %p224
        %p406 = pneg %p248
        %p407 = pneg %p245
        %p408 = pneg %p269
        %p409 = pneg %p266
        %p410 = pneg %p290
        %p411 = pneg %p287
        %p412 = pneg %p318
        %p413 = pneg %p315
        %s414 = sand.u32 %s305, 1
        %s415 = scalar_lea.sflag [#allocation4], %s414
        %s416 = sand.u32 %s305, 1
        %s417 = smul.addr %s416, 8
        %s418 = scalar_lea.vmem [#allocation3], %s417
        %p419 = scmp.lt.s32.totalorder %s30, 1
        %s420 = scalar_select %p419, %s30, 1
        %s421 = smul.addr %s420, 8
        %s422 = scalar_lea.vmem %s0, %s421
        %p423 = scmp.eq.s32.totalorder %s31, 0
        // Predicated region
        $region69: #{tpu_custom_call.1} parent=67 // pred_check
          %p424 = pneg %p423
        $region70: #{tpu_custom_call.1} parent=67 // pred_check_branch
          %426 = sbr.rel (%p424) target = $region72
        $region71: #{tpu_custom_call.1} parent=67 // pred_region
          %v427 = vld [vmem:[%s422] sm:$0xff]
          %v428 = vld [vmem:[%s2] sm:$0xff]
          %v429 = vld [vmem:[%s2 + $0x8] sm:$0xff]
          %v430 = vld [vmem:[%s2 + $0x10] sm:$0xff]
          %v431 = vld [vmem:[%s2 + $0x18] sm:$0xff]
          %v432 = vld [vmem:[%s2 + $0x20] sm:$0xff]
          %v433 = vld [vmem:[%s2 + $0x28] sm:$0xff]
          %v434 = vld [vmem:[%s2 + $0x30] sm:$0xff]
          %v435 = vld [vmem:[%s2 + $0x38] sm:$0xff]
          %vm436 = vcmask 261120
          %v438 = vsel %vm436, %v427, 0
          %440 = vmatprep.subr.mxu0 0.0
          %441 = vmatpush1.msra.mxu0 0.0
          %442 = vmatprep.subr.mxu0 0.0
          %443 = vmatpush1.msra.mxu0 0.0
          %444 = vmatprep.subr.mxu0 0.0
          %445 = vmatpush1.msra.mxu0 0.0
          %446 = vmatprep.subr.mxu0 0.0
          %447 = vmatpush1.msra.mxu0 0.0
          %448 = vmatprep.subr.mxu0 0.0
          %449 = vmatpush1.msra.mxu0 0.0
          %450 = vmatprep.subr.mxu0 0.0
          %451 = vmatpush1.msra.mxu0 0.0
          %452 = vmatprep.subr.mxu0 0.0
          %453 = vmatpush1.msra.mxu0 0.0
          %454 = vmatprep.subr.mxu0 0.0
          %455 = vmatpush1.msra.mxu0 0.0
          %456 = vmatprep.subr.mxu0 0.0
          %457 = vmatpush1.msra.mxu0 0.0
          %458 = vmatprep.subr.mxu0 0.0
          %459 = vmatpush1.msra.mxu0 0.0
          %460 = vmatprep.subr.mxu0 0.0
          %461 = vmatpush1.msra.mxu0 0.0
          %462 = vmatprep.subr.mxu0 0.0
          %463 = vmatpush1.msra.mxu0 0.0
          %464 = vmatprep.subr.mxu0 %v435
          %465 = vmatpush1.msra.mxu0 %v434
          %466 = vmatprep.subr.mxu0 %v433
          %467 = vmatpush1.msra.mxu0 %v432
          %468 = vmatprep.subr.mxu0 %v431
          %469 = vmatpush1.msra.mxu0 %v430
          %470 = vmatprep.subr.mxu0 %v429
          %471 = vmatpush1.msra.mxu0 %v428
          %472 = vmatprep.subr.mxu0 0.0
          %473 = vmatpush2.msra.mxu0 0.0
          %474 = vmatprep.subr.mxu0 0.0
          %475 = vmatpush2.msra.mxu0 0.0
          %476 = vmatprep.subr.mxu0 0.0
          %477 = vmatpush2.msra.mxu0 0.0
          %478 = vmatprep.subr.mxu0 0.0
          %479 = vmatpush2.msra.mxu0 0.0
          %480 = vmatprep.subr.mxu0 0.0
          %481 = vmatpush2.msra.mxu0 0.0
          %482 = vmatprep.subr.mxu0 0.0
          %483 = vmatpush2.msra.mxu0 0.0
          %484 = vmatprep.subr.mxu0 0.0
          %485 = vmatpush2.msra.mxu0 0.0
          %486 = vmatprep.subr.mxu0 0.0
          %487 = vmatpush2.msra.mxu0 0.0
          %488 = vmatprep.subr.mxu0 0.0
          %489 = vmatpush2.msra.mxu0 0.0
          %490 = vmatprep.subr.mxu0 0.0
          %491 = vmatpush2.msra.mxu0 0.0
          %492 = vmatprep.subr.mxu0 0.0
          %493 = vmatpush2.msra.mxu0 0.0
          %494 = vmatprep.subr.mxu0 0.0
          %495 = vmatpush2.msra.mxu0 0.0
          %496 = vmatprep.subr.mxu0 0.0
          %497 = vmatpush2.msra.mxu0 0.0
          %498 = vmatprep.subr.mxu0 0.0
          %499 = vmatpush2.msra.mxu0 0.0
          %500 = vmatprep.subr.mxu0 0.0
          %501 = vmatpush2.msra.mxu0 0.0
          %502 = vmatprep.subr.mxu0 0.0
          %503 = vmatpush2.msra.mxu0 0.0
          %504 = vmatprep.mubr.f32.mxu0 0.0
          %505 = vmatmul.mubr.f32.gmra.mxu0 %v438
          %v506 = vpop.f32.mrf.mxu0
          %v507 = vadd.f32 0.0, %v506
          %v508 = vpop.f32.mrf.mxu0
          %v509 = vadd.f32 0.0, %v508
          %510 = vdwg.mxu0
          %511 = vst [vmem:[#allocation2] sm:$0xff] %v507
          %512 = vst [vmem:[#allocation2 + $0x8] sm:$0xff] %v509
        $region72: #{tpu_custom_call.1} parent=67 // pred_fallthru
          _
        %s513 = smul.u32 %s31, 8
        %s514 = scalar_lea.vmem %s422, %s513
        %v515 = vld [vmem:[%s514] sm:$0xff]
        %v516 = vld [vmem:[%s1] sm:$0xff]
        %v517 = vld [vmem:[%s1 + $0x8] sm:$0xff]
        %v518 = vld [vmem:[%s1 + $0x10] sm:$0xff]
        %v519 = vld [vmem:[%s1 + $0x18] sm:$0xff]
        %vm520 = vcmask 261120
        %v522 = vsel %vm520, %v515, 0
        %524 = vmatprep.subr.mxu0 0.0
        %525 = vmatpush1.msra.mxu0 0.0
        %526 = vmatprep.subr.mxu0 0.0
        %527 = vmatpush1.msra.mxu0 0.0
        %528 = vmatprep.subr.mxu0 0.0
        %529 = vmatpush1.msra.mxu0 0.0
        %530 = vmatprep.subr.mxu0 0.0
        %531 = vmatpush1.msra.mxu0 0.0
        %532 = vmatprep.subr.mxu0 0.0
        %533 = vmatpush1.msra.mxu0 0.0
        %534 = vmatprep.subr.mxu0 0.0
        %535 = vmatpush1.msra.mxu0 0.0
        %536 = vmatprep.subr.mxu0 0.0
        %537 = vmatpush1.msra.mxu0 0.0
        %538 = vmatprep.subr.mxu0 0.0
        %539 = vmatpush1.msra.mxu0 0.0
        %540 = vmatprep.subr.mxu0 0.0
        %541 = vmatpush1.msra.mxu0 0.0
        %542 = vmatprep.subr.mxu0 0.0
        %543 = vmatpush1.msra.mxu0 0.0
        %544 = vmatprep.subr.mxu0 0.0
        %545 = vmatpush1.msra.mxu0 0.0
        %546 = vmatprep.subr.mxu0 0.0
        %547 = vmatpush1.msra.mxu0 0.0
        %548 = vmatprep.subr.mxu0 0.0
        %549 = vmatpush1.msra.mxu0 %v519
        %550 = vmatprep.subr.mxu0 0.0
        %551 = vmatpush1.msra.mxu0 %v518
        %552 = vmatprep.subr.mxu0 0.0
        %553 = vmatpush1.msra.mxu0 %v517
        %554 = vmatprep.subr.mxu0 0.0
        %555 = vmatpush1.msra.mxu0 %v516
        %556 = vmatprep.subr.mxu0 0.0
        %557 = vmatpush2.msra.mxu0 0.0
        %558 = vmatprep.subr.mxu0 0.0
        %559 = vmatpush2.msra.mxu0 0.0
        %560 = vmatprep.subr.mxu0 0.0
        %561 = vmatpush2.msra.mxu0 0.0
        %562 = vmatprep.subr.mxu0 0.0
        %563 = vmatpush2.msra.mxu0 0.0
        %564 = vmatprep.subr.mxu0 0.0
        %565 = vmatpush2.msra.mxu0 0.0
        %566 = vmatprep.subr.mxu0 0.0
        %567 = vmatpush2.msra.mxu0 0.0
        %568 = vmatprep.subr.mxu0 0.0
        %569 = vmatpush2.msra.mxu0 0.0
        %570 = vmatprep.subr.mxu0 0.0
        %571 = vmatpush2.msra.mxu0 0.0
        %572 = vmatprep.subr.mxu0 0.0
        %573 = vmatpush2.msra.mxu0 0.0
        %574 = vmatprep.subr.mxu0 0.0
        %575 = vmatpush2.msra.mxu0 0.0
        %576 = vmatprep.subr.mxu0 0.0
        %577 = vmatpush2.msra.mxu0 0.0
        %578 = vmatprep.subr.mxu0 0.0
        %579 = vmatpush2.msra.mxu0 0.0
        %580 = vmatprep.subr.mxu0 0.0
        %581 = vmatpush2.msra.mxu0 0.0
        %582 = vmatprep.subr.mxu0 0.0
        %583 = vmatpush2.msra.mxu0 0.0
        %584 = vmatprep.subr.mxu0 0.0
        %585 = vmatpush2.msra.mxu0 0.0
        %586 = vmatprep.subr.mxu0 0.0
        %587 = vmatpush2.msra.mxu0 0.0
        %588 = vmatprep.mubr.f32.mxu0 0.0
        %589 = vmatmul.mubr.f32.gmra.mxu0 %v522
        %v590 = vpop.f32.mrf.mxu0
        %v591 = vadd.f32 0.0, %v590
        %v592 = vpop.f32.mrf.mxu0
        %593 = vdwg.mxu0
        %v594 = vld [vmem:[#allocation2] sm:$0xff]
        %v595 = vld [vmem:[#allocation2 + $0x8] sm:$0xff]
        %596 = vmatprep.subr.mxu0 0.0
        %597 = vmatpush1.xpose.msra.mxu0 0.0
        %598 = vmatprep.subr.mxu0 0.0
        %599 = vmatpush1.xpose.msra.mxu0 0.0
        %600 = vmatprep.subr.mxu0 0.0
        %601 = vmatpush1.xpose.msra.mxu0 0.0
        %602 = vmatprep.subr.mxu0 0.0
        %603 = vmatpush1.xpose.msra.mxu0 0.0
        %604 = vmatprep.subr.mxu0 0.0
        %605 = vmatpush1.xpose.msra.mxu0 0.0
        %606 = vmatprep.subr.mxu0 0.0
        %607 = vmatpush1.xpose.msra.mxu0 0.0
        %608 = vmatprep.subr.mxu0 0.0
        %609 = vmatpush1.xpose.msra.mxu0 0.0
        %610 = vmatprep.subr.mxu0 0.0
        %611 = vmatpush1.xpose.msra.mxu0 0.0
        %612 = vmatprep.subr.mxu0 0.0
        %613 = vmatpush1.xpose.msra.mxu0 0.0
        %614 = vmatprep.subr.mxu0 0.0
        %615 = vmatpush1.xpose.msra.mxu0 0.0
        %616 = vmatprep.subr.mxu0 0.0
        %617 = vmatpush1.xpose.msra.mxu0 0.0
        %618 = vmatprep.subr.mxu0 0.0
        %619 = vmatpush1.xpose.msra.mxu0 0.0
        %620 = vmatprep.subr.mxu0 0.0
        %621 = vmatpush1.xpose.msra.mxu0 0.0
        %622 = vmatprep.subr.mxu0 0.0
        %623 = vmatpush1.xpose.msra.mxu0 0.0
        %624 = vmatprep.subr.mxu0 0.0
        %625 = vmatpush1.xpose.msra.mxu0 0.0
        %626 = vmatprep.subr.mxu0 0.0
        %627 = vmatpush1.xpose.msra.mxu0 %v594
        %628 = vmatprep.subr.mxu0 0.0
        %629 = vmatpush2.xpose.msra.mxu0 0.0
        %630 = vmatprep.subr.mxu0 0.0
        %631 = vmatpush2.xpose.msra.mxu0 0.0
        %632 = vmatprep.subr.mxu0 0.0
        %633 = vmatpush2.xpose.msra.mxu0 0.0
        %634 = vmatprep.subr.mxu0 0.0
        %635 = vmatpush2.xpose.msra.mxu0 0.0
        %636 = vmatprep.subr.mxu0 0.0
        %637 = vmatpush2.xpose.msra.mxu0 0.0
        %638 = vmatprep.subr.mxu0 0.0
        %639 = vmatpush2.xpose.msra.mxu0 0.0
        %640 = vmatprep.subr.mxu0 0.0
        %641 = vmatpush2.xpose.msra.mxu0 0.0
        %642 = vmatprep.subr.mxu0 0.0
        %643 = vmatpush2.xpose.msra.mxu0 0.0
        %644 = vmatprep.subr.mxu0 0.0
        %645 = vmatpush2.xpose.msra.mxu0 0.0
        %646 = vmatprep.subr.mxu0 0.0
        %647 = vmatpush2.xpose.msra.mxu0 0.0
        %648 = vmatprep.subr.mxu0 0.0
        %649 = vmatpush2.xpose.msra.mxu0 0.0
        %650 = vmatprep.subr.mxu0 0.0
        %651 = vmatpush2.xpose.msra.mxu0 0.0
        %652 = vmatprep.subr.mxu0 0.0
        %653 = vmatpush2.xpose.msra.mxu0 0.0
        %654 = vmatprep.subr.mxu0 0.0
        %655 = vmatpush2.xpose.msra.mxu0 0.0
        %656 = vmatprep.subr.mxu0 0.0
        %657 = vmatpush2.xpose.msra.mxu0 0.0
        %658 = vmatprep.subr.mxu0 0.0
        %659 = vmatpush2.xpose.msra.mxu0 0.0
        %660 = vmatprep.mubr.f32.mxu0 0.0
        %661 = vmatmul.mubr.f32.gmra.mxu0 %v591
        %v662 = vpop.f32.mrf.mxu0
        %v663 = vadd.f32 0.0, %v662
        %v664 = vpop.f32.mrf.mxu0
        %665 = vdwg.mxu0
        %vm666 = vcmask 64512
        %v667 = vsel %vm666, %v663, -inf
        %668 = vmax.xlane.f32.xlu0 %v667
        %v669 = vpop.xlane.xlu0 %668
        %v670 = vsub.f32 %v663, %v669
        %v671 = vmul.f32 %v670, 1.442695
        %v672 = vpow.pop %v671
        %v673 = vsel %vm666, %v672, 0.0
        %674 = vadd.xlane.f32.xlu0 %v673
        %v675 = vpop.xlane.xlu0 %674
        %v677 = vsel %vm666, %v672, 0
        %679 = vmatprep.subr.mxu0 0.0
        %680 = vmatpush1.msra.mxu0 0.0
        %681 = vmatprep.subr.mxu0 0.0
        %682 = vmatpush1.msra.mxu0 0.0
        %683 = vmatprep.subr.mxu0 0.0
        %684 = vmatpush1.msra.mxu0 0.0
        %685 = vmatprep.subr.mxu0 0.0
        %686 = vmatpush1.msra.mxu0 0.0
        %687 = vmatprep.subr.mxu0 0.0
        %688 = vmatpush1.msra.mxu0 0.0
        %689 = vmatprep.subr.mxu0 0.0
        %690 = vmatpush1.msra.mxu0 0.0
        %691 = vmatprep.subr.mxu0 0.0
        %692 = vmatpush1.msra.mxu0 0.0
        %693 = vmatprep.subr.mxu0 0.0
        %694 = vmatpush1.msra.mxu0 0.0
        %695 = vmatprep.subr.mxu0 0.0
        %696 = vmatpush1.msra.mxu0 0.0
        %697 = vmatprep.subr.mxu0 0.0
        %698 = vmatpush1.msra.mxu0 0.0
        %699 = vmatprep.subr.mxu0 0.0
        %700 = vmatpush1.msra.mxu0 0.0
        %701 = vmatprep.subr.mxu0 0.0
        %702 = vmatpush1.msra.mxu0 0.0
        %703 = vmatprep.subr.mxu0 0.0
        %704 = vmatpush1.msra.mxu0 0.0
        %705 = vmatprep.subr.mxu0 0.0
        %706 = vmatpush1.msra.mxu0 0.0
        %707 = vmatprep.subr.mxu0 0.0
        %708 = vmatpush1.msra.mxu0 0.0
        %709 = vmatprep.subr.mxu0 0.0
        %710 = vmatpush1.msra.mxu0 %v595
        %711 = vmatprep.subr.mxu0 0.0
        %712 = vmatpush2.msra.mxu0 0.0
        %713 = vmatprep.subr.mxu0 0.0
        %714 = vmatpush2.msra.mxu0 0.0
        %715 = vmatprep.subr.mxu0 0.0
        %716 = vmatpush2.msra.mxu0 0.0
        %717 = vmatprep.subr.mxu0 0.0
        %718 = vmatpush2.msra.mxu0 0.0
        %719 = vmatprep.subr.mxu0 0.0
        %720 = vmatpush2.msra.mxu0 0.0
        %721 = vmatprep.subr.mxu0 0.0
        %722 = vmatpush2.msra.mxu0 0.0
        %723 = vmatprep.subr.mxu0 0.0
        %724 = vmatpush2.msra.mxu0 0.0
        %725 = vmatprep.subr.mxu0 0.0
        %726 = vmatpush2.msra.mxu0 0.0
        %727 = vmatprep.subr.mxu0 0.0
        %728 = vmatpush2.msra.mxu0 0.0
        %729 = vmatprep.subr.mxu0 0.0
        %730 = vmatpush2.msra.mxu0 0.0
        %731 = vmatprep.subr.mxu0 0.0
        %732 = vmatpush2.msra.mxu0 0.0
        %733 = vmatprep.subr.mxu0 0.0
        %734 = vmatpush2.msra.mxu0 0.0
        %735 = vmatprep.subr.mxu0 0.0
        %736 = vmatpush2.msra.mxu0 0.0
        %737 = vmatprep.subr.mxu0 0.0
        %738 = vmatpush2.msra.mxu0 0.0
        %739 = vmatprep.subr.mxu0 0.0
        %740 = vmatpush2.msra.mxu0 0.0
        %741 = vmatprep.subr.mxu0 0.0
        %742 = vmatpush2.msra.mxu0 0.0
        %743 = vmatprep.mubr.f32.mxu0 0.0
        %744 = vmatmul.mubr.f32.gmra.mxu0 %v677
        %v745 = vpop.f32.mrf.mxu0
        %v746 = vadd.f32 0.0, %v745
        %v747 = vpop.f32.mrf.mxu0
        %748 = vdwg.mxu0
        %v749 = vrcp.pop %v675
        %v750 = vmul.f32 %v746, %v749
        %v751 = vld [vmem:[%s3] sm:$0xff]
        %v752 = vld [vmem:[%s3 + $0x8] sm:$0xff]
        %v753 = vld [vmem:[%s3 + $0x10] sm:$0xff]
        %v754 = vld [vmem:[%s3 + $0x18] sm:$0xff]
        %v755 = vld [vmem:[%s3 + $0x20] sm:$0xff]
        %v756 = vld [vmem:[%s3 + $0x28] sm:$0xff]
        %v757 = vld [vmem:[%s3 + $0x30] sm:$0xff]
        %v758 = vld [vmem:[%s3 + $0x38] sm:$0xff]
        %v759 = vld [vmem:[%s3 + $0x40] sm:$0xff]
        %v760 = vld [vmem:[%s3 + $0x48] sm:$0xff]
        %v761 = vld [vmem:[%s3 + $0x50] sm:$0xff]
        %v762 = vld [vmem:[%s3 + $0x58] sm:$0xff]
        %v763 = vld [vmem:[%s3 + $0x60] sm:$0xff]
        %v764 = vld [vmem:[%s3 + $0x68] sm:$0xff]
        %v765 = vld [vmem:[%s3 + $0x70] sm:$0xff]
        %v766 = vld [vmem:[%s3 + $0x78] sm:$0xff]
        %767 = vmatprep.subr.mxu0 0.0
        %768 = vmatpush1.msra.mxu0 %v766
        %769 = vmatprep.subr.mxu0 0.0
        %770 = vmatpush1.msra.mxu0 %v765
        %771 = vmatprep.subr.mxu0 0.0
        %772 = vmatpush1.msra.mxu0 %v764
        %773 = vmatprep.subr.mxu0 0.0
        %774 = vmatpush1.msra.mxu0 %v763
        %775 = vmatprep.subr.mxu0 0.0
        %776 = vmatpush1.msra.mxu0 %v762
        %777 = vmatprep.subr.mxu0 0.0
        %778 = vmatpush1.msra.mxu0 %v761
        %779 = vmatprep.subr.mxu0 0.0
        %780 = vmatpush1.msra.mxu0 %v760
        %781 = vmatprep.subr.mxu0 0.0
        %782 = vmatpush1.msra.mxu0 %v759
        %783 = vmatprep.subr.mxu0 0.0
        %784 = vmatpush1.msra.mxu0 %v758
        %785 = vmatprep.subr.mxu0 0.0
        %786 = vmatpush1.msra.mxu0 %v757
        %787 = vmatprep.subr.mxu0 0.0
        %788 = vmatpush1.msra.mxu0 %v756
        %789 = vmatprep.subr.mxu0 0.0
        %790 = vmatpush1.msra.mxu0 %v755
        %791 = vmatprep.subr.mxu0 0.0
        %792 = vmatpush1.msra.mxu0 %v754
        %793 = vmatprep.subr.mxu0 0.0
        %794 = vmatpush1.msra.mxu0 %v753
        %795 = vmatprep.subr.mxu0 0.0
        %796 = vmatpush1.msra.mxu0 %v752
        %797 = vmatprep.subr.mxu0 0.0
        %798 = vmatpush1.msra.mxu0 %v751
        %799 = vmatprep.subr.mxu0 0.0
        %800 = vmatpush2.msra.mxu0 0.0
        %801 = vmatprep.subr.mxu0 0.0
        %802 = vmatpush2.msra.mxu0 0.0
        %803 = vmatprep.subr.mxu0 0.0
        %804 = vmatpush2.msra.mxu0 0.0
        %805 = vmatprep.subr.mxu0 0.0
        %806 = vmatpush2.msra.mxu0 0.0
        %807 = vmatprep.subr.mxu0 0.0
        %808 = vmatpush2.msra.mxu0 0.0
        %809 = vmatprep.subr.mxu0 0.0
        %810 = vmatpush2.msra.mxu0 0.0
        %811 = vmatprep.subr.mxu0 0.0
        %812 = vmatpush2.msra.mxu0 0.0
        %813 = vmatprep.subr.mxu0 0.0
        %814 = vmatpush2.msra.mxu0 0.0
        %815 = vmatprep.subr.mxu0 0.0
        %816 = vmatpush2.msra.mxu0 0.0
        %817 = vmatprep.subr.mxu0 0.0
        %818 = vmatpush2.msra.mxu0 0.0
        %819 = vmatprep.subr.mxu0 0.0
        %820 = vmatpush2.msra.mxu0 0.0
        %821 = vmatprep.subr.mxu0 0.0
        %822 = vmatpush2.msra.mxu0 0.0
        %823 = vmatprep.subr.mxu0 0.0
        %824 = vmatpush2.msra.mxu0 0.0
        %825 = vmatprep.subr.mxu0 0.0
        %826 = vmatpush2.msra.mxu0 0.0
        %827 = vmatprep.subr.mxu0 0.0
        %828 = vmatpush2.msra.mxu0 0.0
        %829 = vmatprep.subr.mxu0 0.0
        %830 = vmatpush2.msra.mxu0 0.0
        %831 = vmatprep.mubr.f32.mxu0 0.0
        %832 = vmatmul.mubr.f32.gmra.mxu0 %v750
        %v833 = vpop.f32.mrf.mxu0
        %v834 = vadd.f32 0.0, %v833
        %v835 = vpop.f32.mrf.mxu0
        %836 = vdwg.mxu0
        %v837 = vadd.f32 %v515, %v834
        %v838 = vld [vmem:[%s8] sm:$0x1]
        %v839 = vld [vmem:[%s9] sm:$0x1]
        %v840 = vsel %vm520, %v837, 0.0
        %841 = vadd.xlane.f32.xlu0 %v840
        %v842 = vpop.xlane.xlu0 %841
        %v843 = vrcp.pop 32.0
        %v844 = vmul.f32 %v842, %v843
        %v845 = vsub.f32 %v837, %v844
        %v846 = vmul.f32 %v845, %v845
        %v847 = vsel %vm520, %v846, 0.0
        %848 = vadd.xlane.f32.xlu0 %v847
        %v849 = vpop.xlane.xlu0 %848
        %v850 = vmul.f32 %v849, %v843
        %v851 = vadd.f32 %v850, 1e-05
        %v852 = vrsqrt.pop %v851
        %v853 = vmul.f32 %v845, %v852
        %v855 = vlaneseq
        %v856 = vshrl.u32 %v855, 7
        %v857 = vsub.s32 0, %v856
        %v858 = vrot.slane %v838, %v857
        %v860 = vmul.f32 %v853, %v858
        %v862 = vlaneseq
        %v863 = vshrl.u32 %v862, 7
        %v864 = vsub.s32 0, %v863
        %v865 = vrot.slane %v839, %v864
        %v867 = vadd.f32 %v860, %v865
        %v868 = vld [vmem:[%s4] sm:$0xff]
        %v869 = vld [vmem:[%s4 + $0x8] sm:$0xff]
        %v870 = vld [vmem:[%s4 + $0x10] sm:$0xff]
        %v871 = vld [vmem:[%s4 + $0x18] sm:$0xff]
        %v872 = vld [vmem:[%s5] sm:$0x1]
        %v874 = vlaneseq
        %v875 = vshrl.u32 %v874, 7
        %v876 = vsub.s32 0, %v875
        %v877 = vrot.slane %v872, %v876
        %v880 = vsel %vm520, %v867, 0
        %882 = vmatprep.subr.mxu0 0.0
        %883 = vmatpush1.msra.mxu0 0.0
        %884 = vmatprep.subr.mxu0 0.0
        %885 = vmatpush1.msra.mxu0 0.0
        %886 = vmatprep.subr.mxu0 0.0
        %887 = vmatpush1.msra.mxu0 0.0
        %888 = vmatprep.subr.mxu0 0.0
        %889 = vmatpush1.msra.mxu0 0.0
        %890 = vmatprep.subr.mxu0 0.0
        %891 = vmatpush1.msra.mxu0 0.0
        %892 = vmatprep.subr.mxu0 0.0
        %893 = vmatpush1.msra.mxu0 0.0
        %894 = vmatprep.subr.mxu0 0.0
        %895 = vmatpush1.msra.mxu0 0.0
        %896 = vmatprep.subr.mxu0 0.0
        %897 = vmatpush1.msra.mxu0 0.0
        %898 = vmatprep.subr.mxu0 0.0
        %899 = vmatpush1.msra.mxu0 0.0
        %900 = vmatprep.subr.mxu0 0.0
        %901 = vmatpush1.msra.mxu0 0.0
        %902 = vmatprep.subr.mxu0 0.0
        %903 = vmatpush1.msra.mxu0 0.0
        %904 = vmatprep.subr.mxu0 0.0
        %905 = vmatpush1.msra.mxu0 0.0
        %906 = vmatprep.subr.mxu0 0.0
        %907 = vmatpush1.msra.mxu0 %v871
        %908 = vmatprep.subr.mxu0 0.0
        %909 = vmatpush1.msra.mxu0 %v870
        %910 = vmatprep.subr.mxu0 0.0
        %911 = vmatpush1.msra.mxu0 %v869
        %912 = vmatprep.subr.mxu0 0.0
        %913 = vmatpush1.msra.mxu0 %v868
        %914 = vmatprep.subr.mxu0 0.0
        %915 = vmatpush2.msra.mxu0 0.0
        %916 = vmatprep.subr.mxu0 0.0
        %917 = vmatpush2.msra.mxu0 0.0
        %918 = vmatprep.subr.mxu0 0.0
        %919 = vmatpush2.msra.mxu0 0.0
        %920 = vmatprep.subr.mxu0 0.0
        %921 = vmatpush2.msra.mxu0 0.0
        %922 = vmatprep.subr.mxu0 0.0
        %923 = vmatpush2.msra.mxu0 0.0
        %924 = vmatprep.subr.mxu0 0.0
        %925 = vmatpush2.msra.mxu0 0.0
        %926 = vmatprep.subr.mxu0 0.0
        %927 = vmatpush2.msra.mxu0 0.0
        %928 = vmatprep.subr.mxu0 0.0
        %929 = vmatpush2.msra.mxu0 0.0
        %930 = vmatprep.subr.mxu0 0.0
        %931 = vmatpush2.msra.mxu0 0.0
        %932 = vmatprep.subr.mxu0 0.0
        %933 = vmatpush2.msra.mxu0 0.0
        %934 = vmatprep.subr.mxu0 0.0
        %935 = vmatpush2.msra.mxu0 0.0
        %936 = vmatprep.subr.mxu0 0.0
        %937 = vmatpush2.msra.mxu0 0.0
        %938 = vmatprep.subr.mxu0 0.0
        %939 = vmatpush2.msra.mxu0 0.0
        %940 = vmatprep.subr.mxu0 0.0
        %941 = vmatpush2.msra.mxu0 0.0
        %942 = vmatprep.subr.mxu0 0.0
        %943 = vmatpush2.msra.mxu0 0.0
        %944 = vmatprep.subr.mxu0 0.0
        %945 = vmatpush2.msra.mxu0 0.0
        %946 = vmatprep.mubr.f32.mxu0 0.0
        %947 = vmatmul.mubr.f32.gmra.mxu0 %v880
        %v948 = vpop.f32.mrf.mxu0
        %v949 = vadd.f32 %v877, %v948
        %v950 = vpop.f32.mrf.mxu0
        %951 = vdwg.mxu0
        %v952 = vmul.f32 %v949, 0.5
        %v953 = vmul.f32 %v949, 0.70710677
        %v954 = verf.f32.pop %v953
        %v955 = vadd.f32 %v954, 1.0
        %v956 = vmul.f32 %v952, %v955
        %v957 = vld [vmem:[%s6] sm:$0xff]
        %v958 = vld [vmem:[%s6 + $0x8] sm:$0xff]
        %v959 = vld [vmem:[%s6 + $0x10] sm:$0xff]
        %v960 = vld [vmem:[%s6 + $0x18] sm:$0xff]
        %v961 = vld [vmem:[%s6 + $0x20] sm:$0xff]
        %v962 = vld [vmem:[%s6 + $0x28] sm:$0xff]
        %v963 = vld [vmem:[%s6 + $0x30] sm:$0xff]
        %v964 = vld [vmem:[%s6 + $0x38] sm:$0xff]
        %v965 = vld [vmem:[%s6 + $0x40] sm:$0xff]
        %v966 = vld [vmem:[%s6 + $0x48] sm:$0xff]
        %v967 = vld [vmem:[%s6 + $0x50] sm:$0xff]
        %v968 = vld [vmem:[%s6 + $0x58] sm:$0xff]
        %v969 = vld [vmem:[%s7] sm:$0x1]
        %v971 = vlaneseq
        %v972 = vshrl.u32 %v971, 7
        %v973 = vsub.s32 0, %v972
        %v974 = vrot.slane %v969, %v973
        %vm976 = vcmask 785408
        %v978 = vsel %vm976, %v956, 0
        %980 = vmatprep.subr.mxu0 0.0
        %981 = vmatpush1.msra.mxu0 0.0
        %982 = vmatprep.subr.mxu0 0.0
        %983 = vmatpush1.msra.mxu0 0.0
        %984 = vmatprep.subr.mxu0 0.0
        %985 = vmatpush1.msra.mxu0 0.0
        %986 = vmatprep.subr.mxu0 0.0
        %987 = vmatpush1.msra.mxu0 0.0
        %988 = vmatprep.subr.mxu0 0.0
        %989 = vmatpush1.msra.mxu0 %v968
        %990 = vmatprep.subr.mxu0 0.0
        %991 = vmatpush1.msra.mxu0 %v967
        %992 = vmatprep.subr.mxu0 0.0
        %993 = vmatpush1.msra.mxu0 %v966
        %994 = vmatprep.subr.mxu0 0.0
        %995 = vmatpush1.msra.mxu0 %v965
        %996 = vmatprep.subr.mxu0 0.0
        %997 = vmatpush1.msra.mxu0 %v964
        %998 = vmatprep.subr.mxu0 0.0
        %999 = vmatpush1.msra.mxu0 %v963
        %1000 = vmatprep.subr.mxu0 0.0
        %1001 = vmatpush1.msra.mxu0 %v962
        %1002 = vmatprep.subr.mxu0 0.0
        %1003 = vmatpush1.msra.mxu0 %v961
        %1004 = vmatprep.subr.mxu0 0.0
        %1005 = vmatpush1.msra.mxu0 %v960
        %1006 = vmatprep.subr.mxu0 0.0
        %1007 = vmatpush1.msra.mxu0 %v959
        %1008 = vmatprep.subr.mxu0 0.0
        %1009 = vmatpush1.msra.mxu0 %v958
        %1010 = vmatprep.subr.mxu0 0.0
        %1011 = vmatpush1.msra.mxu0 %v957
        %1012 = vmatprep.subr.mxu0 0.0
        %1013 = vmatpush2.msra.mxu0 0.0
        %1014 = vmatprep.subr.mxu0 0.0
        %1015 = vmatpush2.msra.mxu0 0.0
        %1016 = vmatprep.subr.mxu0 0.0
        %1017 = vmatpush2.msra.mxu0 0.0
        %1018 = vmatprep.subr.mxu0 0.0
        %1019 = vmatpush2.msra.mxu0 0.0
        %1020 = vmatprep.subr.mxu0 0.0
        %1021 = vmatpush2.msra.mxu0 0.0
        %1022 = vmatprep.subr.mxu0 0.0
        %1023 = vmatpush2.msra.mxu0 0.0
        %1024 = vmatprep.subr.mxu0 0.0
        %1025 = vmatpush2.msra.mxu0 0.0
        %1026 = vmatprep.subr.mxu0 0.0
        %1027 = vmatpush2.msra.mxu0 0.0
        %1028 = vmatprep.subr.mxu0 0.0
        %1029 = vmatpush2.msra.mxu0 0.0
        %1030 = vmatprep.subr.mxu0 0.0
        %1031 = vmatpush2.msra.mxu0 0.0
        %1032 = vmatprep.subr.mxu0 0.0
        %1033 = vmatpush2.msra.mxu0 0.0
        %1034 = vmatprep.subr.mxu0 0.0
        %1035 = vmatpush2.msra.mxu0 0.0
        %1036 = vmatprep.subr.mxu0 0.0
        %1037 = vmatpush2.msra.mxu0 0.0
        %1038 = vmatprep.subr.mxu0 0.0
        %1039 = vmatpush2.msra.mxu0 0.0
        %1040 = vmatprep.subr.mxu0 0.0
        %1041 = vmatpush2.msra.mxu0 0.0
        %1042 = vmatprep.subr.mxu0 0.0
        %1043 = vmatpush2.msra.mxu0 0.0
        %1044 = vmatprep.mubr.f32.mxu0 0.0
        %1045 = vmatmul.mubr.f32.gmra.mxu0 %v978
        %v1046 = vpop.f32.mrf.mxu0
        %v1047 = vadd.f32 %v974, %v1046
        %v1048 = vpop.f32.mrf.mxu0
        %1049 = vdwg.mxu0
        %v1050 = vadd.f32 %v867, %v1047
        %v1051 = vld [vmem:[%s10] sm:$0x1]
        %v1052 = vld [vmem:[%s11] sm:$0x1]
        %v1053 = vsel %vm520, %v1050, 0.0
        %1054 = vadd.xlane.f32.xlu0 %v1053
        %v1055 = vpop.xlane.xlu0 %1054
        %v1056 = vmul.f32 %v1055, %v843
        %v1057 = vsub.f32 %v1050, %v1056
        %v1058 = vmul.f32 %v1057, %v1057
        %v1059 = vsel %vm520, %v1058, 0.0
        %1060 = vadd.xlane.f32.xlu0 %v1059
        %v1061 = vpop.xlane.xlu0 %1060
        %v1062 = vmul.f32 %v1061, %v843
        %v1063 = vadd.f32 %v1062, 1e-05
        %v1064 = vrsqrt.pop %v1063
        %v1065 = vmul.f32 %v1057, %v1064
        %v1067 = vlaneseq
        %v1068 = vshrl.u32 %v1067, 7
        %v1069 = vsub.s32 0, %v1068
        %v1070 = vrot.slane %v1051, %v1069
        %v1072 = vmul.f32 %v1065, %v1070
        %v1074 = vlaneseq
        %v1075 = vshrl.u32 %v1074, 7
        %v1076 = vsub.s32 0, %v1075
        %v1077 = vrot.slane %v1052, %v1076
        %v1079 = vadd.f32 %v1072, %v1077
        %1080 = vst.msk [vmem:[%s418] sm:$0xff] %vm520, %v1079
        %s1081 = sand.u32 %s305, 1
        %s1082 = scalar_lea.sflag [#allocation4], %s1081
        %s1083 = sand.u32 %s305, 1
        %s1084 = smul.addr %s1083, 8
        %s1085 = scalar_lea.vmem [#allocation3], %s1084
        // Predicated region
        $region73: #{tpu_custom_call.1} parent=67 // pred_check
          %p1086 = pneg %p315
        $region74: #{tpu_custom_call.1} parent=67 // pred_check_branch
          %1088 = sbr.rel (%p1086) target = $region76
        $region75: #{tpu_custom_call.1} parent=67 // pred_region
          %s1090 = ssub.s32 128, 128
          %1091 = vsyncadd %s1082, %s1090
          %s1092 = sadd.s32 %s31, %s30
          %s1093 = smul.addr %s1092, 128
          %s1094 = scalar_lea.hbm %s12, %s1093
          %s1096 = sshll.u32 %s1085, 4
          %s1097 = int_to_ptr.vmem [resolvable:$true] %s1096
          %1099 = dma.vmem_to_hbm [thread:$0]  %s1097, 128, %s1094, %s1082
        $region76: #{tpu_custom_call.1} parent=67 // pred_fallthru
          _
      $region68: #{tpu_custom_call.1} parent=5 // pred_fallthru
        _
      %p1100 = scmp.le.s32.totalorder 2, %s21
      // Predicated region
      $region77: #{tpu_custom_call.1} parent=5 // pred_check
        %p1101 = pneg %p1100
      $region78: #{tpu_custom_call.1} parent=5 // pred_check_branch
        %1103 = sbr.rel (%p1101) target = $region80
      $region79: #{tpu_custom_call.1} parent=5 // pred_region
        %s1104 = ssub.s32 %s21, 2
        // Predicated region
        $region81: #{tpu_custom_call.1} parent=79 // pred_check
          %p1105 = pneg %p321
        $region82: #{tpu_custom_call.1} parent=79 // pred_check_branch
          %1107 = sbr.rel (%p1105) target = $region84
        $region83: #{tpu_custom_call.1} parent=79 // pred_region
          %s1108 = sand.u32 %s306, 1
          %s1109 = scalar_lea.sflag [#allocation4], %s1108
          %s1110 = sand.u32 %s306, 1
          %s1111 = smul.addr %s1110, 8
          %s1112 = scalar_lea.vmem [#allocation3], %s1111
          %1113 = dma.done %s1109, 128
        $region84: #{tpu_custom_call.1} parent=79 // pred_fallthru
          _
      $region80: #{tpu_custom_call.1} parent=5 // pred_fallthru
        _
    $region6: #{tpu_custom_call.1} parent=1 // loop_footer
      %s25 = sadd.s32 1, %s21
    $region7: #{tpu_custom_call.1} parent=1 // loop_footer_branch
      %20 = sbr.rel target = $region3
    $region8: #{tpu_custom_call.1} parent=1 // loop_exit
      _
    %1114 = vsyncpa [#allocation4], 1
    %s1115 = scalar_lea.sflag [#allocation4], 1
    %1116 = vsyncpa %s1115, 1

</llo_original>
